<compile_context>
chip_gen: v5e
topology: v5e:2x2
jax: 0.10.0
libtpu: 0.0.40
codegen_flags: <defaults>
</compile_context>

<pallas_src>
import jax
import jax.numpy as jnp
from jax import lax
from jax.experimental import pallas as pl
from jax.experimental.pallas import tpu as pltpu


_ONES_GATE_BIAS = 100.0   # sigmoid(100.0) rounds to exactly 1.0 in f32/bf16


def _round_up(x, m):
    return ((x + m - 1) // m) * m


def _device_kind():
    try:
        return jax.devices()[0].device_kind.lower()
    except Exception:
        return ""


def _default_batch_tile():
    # v5e: 128x128 MXU already full at M=128 and the tightest default scoped
    # VMEM -> smaller tiles.  v6e/v7x: 2x256x256 MXU -> 256-row tiles.
    kind = _device_kind()
    return 128 if ("v5 lite" in kind or "v5e" in kind) else 256


def _is_v7x():
    kind = _device_kind()
    return ("v7" in kind) or ("7x" in kind)


def _layer_step(x, w, b, *, sp, w_dtype):
    """One highway layer on an f32 carry x [tb, Sp].

    w: [Sp, 3*Sp] packed input-major weights (bias folded into row S when
       b is None).  b: [1, 3*Sp] or None.
    """
    z = jnp.dot(x.astype(w_dtype), w, preferred_element_type=jnp.float32)
    if b is not None:
        z = z + b
    h = jnp.maximum(z[:, :sp], 0.0)           # relu(normal_layer(x))
    t = jax.nn.sigmoid(z[:, sp:2 * sp])       # transform gate
    c = jax.nn.sigmoid(z[:, 2 * sp:])         # carry gate
    ht = h * t
    # Lerp form of  x*c + (h*t)*(1-c)  -- numerically identical, 1 fewer VALU op.
    return ht + c * (x - ht)


def highway_network(x, params, *, weight_dtype=jnp.bfloat16, batch_tile=None,
                    stream_layers=None):
    """Forward pass of HighwayNetwork.

    x: [B, S] float32.
    params (stacked PyTorch-layout): wh/wt/wc [L, S, S] (out, in),
                                     bh/bt/bc [L, 1, S].
    weight_dtype: bf16 halves weight HBM/VMEM traffic (accumulation stays f32);
      pass jnp.float32 for bit-strict parity with the reference.
    stream_layers: None = auto (per-layer weight streaming when the resident
      footprint would not fit comfortably in VMEM), or force True/False.
    """
    B, S = x.shape
    L = params["wh"].shape[0]

    Sp = _round_up(S, 128)            # lane-dense feature dim
    fold_bias = Sp > S                # a spare padded input lane exists for the bias
    wbytes = jnp.dtype(weight_dtype).itemsize

    # ---- weight packing: [L, S_out, S_in] -> input-major [L, Sp, 3*Sp] -----
    def pack_gate(w, b):
        wt = jnp.transpose(w, (0, 2, 1))                      # [L, S_in, S_out]
        wt = jnp.pad(wt, ((0, 0), (0, Sp - S), (0, Sp - S)))  # zero pad (invariant!)
        if fold_bias:
            wt = wt.at[:, S, :S].set(b[:, 0, :])              # bias lives in row S
        return wt

    w_cat = jnp.concatenate(
        [pack_gate(params["wh"], params["bh"]),
         pack_gate(params["wt"], params["bt"]),
         pack_gate(params["wc"], params["bc"])], axis=-1)      # [L, Sp, 3*Sp]
    if fold_bias:
        # Keep the ones-lane alive across layers: carry gate == 1.0 exactly at
        # output lane S => y[:, S] = x[:, S] = 1.0 after every layer.
        w_cat = w_cat.at[:, S, 2 * Sp + S].set(_ONES_GATE_BIAS)
    w_cat = w_cat.astype(weight_dtype)

    b_cat = None
    if not fold_bias:                                          # S % 128 == 0 case
        b_cat = jnp.concatenate(
            [jnp.pad(params[k], ((0, 0), (0, 0), (0, Sp - S)))
             for k in ("bh", "bt", "bc")], axis=-1).astype(jnp.float32)

    # ---- batch tiling (multiple of 8, minimal padding, megacore aware) -----
    if batch_tile is None:
        batch_tile = _default_batch_tile()
    batch_tile = max(8, _round_up(int(batch_tile), 8))

    n_tiles = max(1, pl.cdiv(B, batch_tile))
    # v7x has 2 TensorCores: split a single big tile so both get work (only
    # when each half still fills the MXU M dim, so compute dominates the
    # duplicated per-core weight DMA).
    if n_tiles == 1 and _is_v7x() and B >= 256:
        n_tiles = 2
    tb = _round_up(pl.cdiv(B, n_tiles), 8)
    n_tiles = pl.cdiv(B, tb)
    Bp = n_tiles * tb

    xp = jnp.pad(x, ((0, Bp - B), (0, Sp - S)))                # zero pad (invariant!)
    if fold_bias:
        xp = xp.at[:, S].set(1.0)                              # ones-lane for the bias

    # ---- explicit VMEM budget (activations live in VMEM, not vregs) --------
    act = 4
    # 2x in + 2x out pipeline buffers, f32 carry, z[tb,3Sp], ~2 gate temps.
    work_bytes = tb * Sp * act * (2 + 2 + 1 + 3 + 2)
    resident_w_bytes = 2 * L * Sp * 3 * Sp * wbytes            # double-buffered
    stream_w_bytes = 2 * Sp * 3 * Sp * wbytes

    vmem_cap = 64 << 20                                        # safe on every gen
    try:
        vmem_cap = int(pltpu.get_tpu_info().vmem_capacity_bytes)
    except Exception:
        pass

    if stream_layers is None:
        stream_layers = (resident_w_bytes + work_bytes) > (vmem_cap // 2)

    need = (stream_w_bytes if stream_layers else resident_w_bytes) + work_bytes
    vmem_limit = int(min(max(2 * need, 32 << 20), int(vmem_cap * 0.9)))

    compiler_params = pltpu.CompilerParams(
        dimension_semantics=(("parallel", "arbitrary") if stream_layers
                             else ("parallel",)),
        vmem_limit_bytes=vmem_limit)

    w_dt = w_cat.dtype

    if stream_layers:
        # Grid axis 1 iterates layers: only ~2 layers of weights resident and
        # layer-(l+1) weight DMA overlaps layer-l compute.
        def kernel(x_ref, w_ref, *rest):
            if fold_bias:
                out_ref, x_sc = rest
                b = None
            else:
                b_ref, out_ref, x_sc = rest
                b = b_ref[0]
            l = pl.program_id(1)

            @pl.when(l == 0)
            def _():
                x_sc[...] = x_ref[...].astype(jnp.float32)

            y = _layer_step(x_sc[...], w_ref[0], b, sp=Sp, w_dtype=w_dt)
            x_sc[...] = y

            @pl.when(l == pl.num_programs(1) - 1)
            def _():
                out_ref[...] = y.astype(out_ref.dtype)

        grid = (n_tiles, L)
        in_specs = [
            pl.BlockSpec((tb, Sp), lambda i, l: (i, 0)),
            pl.BlockSpec((1, Sp, 3 * Sp), lambda i, l: (l, 0, 0)),
        ]
        operands = [xp, w_cat]
        if not fold_bias:
            in_specs.append(pl.BlockSpec((1, 1, 3 * Sp), lambda i, l: (l, 0, 0)))
            operands.append(b_cat)
        out_specs = pl.BlockSpec((tb, Sp), lambda i, l: (i, 0))
        scratch = [pltpu.VMEM((tb, Sp), jnp.float32)]
    else:
        # All L packed layers resident; unroll only small L (code bloat /
        # live-range growth otherwise).
        unroll = True if L <= 8 else 2

        def kernel(x_ref, w_ref, *rest):
            if fold_bias:
                (out_ref,) = rest
                b_ref = None
            else:
                b_ref, out_ref = rest
            x0 = x_ref[...].astype(jnp.float32)

            def body(l, xc):
                b = None if b_ref is None else b_ref[l]
                return _layer_step(xc, w_ref[l], b, sp=Sp, w_dtype=w_dt)

            y = lax.fori_loop(0, L, body, x0, unroll=unroll)
            out_ref[...] = y.astype(out_ref.dtype)

        grid = (n_tiles,)
        in_specs = [
            pl.BlockSpec((tb, Sp), lambda i: (i, 0)),
            pl.BlockSpec((L, Sp, 3 * Sp), lambda i: (0, 0, 0)),
        ]
        operands = [xp, w_cat]
        if not fold_bias:
            in_specs.append(pl.BlockSpec((L, 1, 3 * Sp), lambda i: (0, 0, 0)))
            operands.append(b_cat)
        out_specs = pl.BlockSpec((tb, Sp), lambda i: (i, 0))
        scratch = []

    out = pl.pallas_call(
        kernel,
        out_shape=jax.ShapeDtypeStruct((Bp, Sp), x.dtype),
        grid_spec=pltpu.PrefetchScalarGridSpec(
            num_scalar_prefetch=0,
            grid=grid,
            in_specs=in_specs,
            out_specs=out_specs,
            scratch_shapes=scratch,
        ),
        compiler_params=compiler_params,
    )(*operands)

    return out[:B, :S]


def highway_reference(x, params):
    """Pure-JAX reference matching the PyTorch module semantics."""
    L = params["wh"].shape[0]
    for l in range(L):
        h = jax.nn.relu(x @ params["wh"][l].T + params["bh"][l, 0])
        t = jax.nn.sigmoid(x @ params["wt"][l].T + params["bt"][l, 0])
        c = jax.nn.sigmoid(x @ params["wc"][l].T + params["bc"][l, 0])
        x = x * c + (h * t) * (1.0 - c)
    return x


def init_params(key, size, num_layers):
    """Deterministic synthetic init (PyTorch Linear-style uniform bound)."""
    bound = 1.0 / jnp.sqrt(size)
    keys = jax.random.split(key, 6)
    shape_w = (num_layers, size, size)   # PyTorch layout: (out, in)
    shape_b = (num_layers, 1, size)
    u = lambda k, s: jax.random.uniform(k, s, jnp.float32, -bound, bound)
    return {
        "wh": u(keys[0], shape_w), "bh": u(keys[1], shape_b),
        "wt": u(keys[2], shape_w), "bt": u(keys[3], shape_b),
        "wc": u(keys[4], shape_w), "bc": u(keys[5], shape_b),
    }


if __name__ == "__main__":
    batch, size, num_layers = 8, 32, 3

    key = jax.random.PRNGKey(0)
    kx, kp = jax.random.split(key)
    x = jax.random.normal(kx, (batch, size), jnp.float32)
    params = init_params(kp, size, num_layers)

    ref = highway_reference(x, params)

    # Resident mode: all layer weights in VMEM, in-kernel layer loop.
    out = highway_network(x, params, weight_dtype=jnp.float32,
                          stream_layers=False)
    out = jax.block_until_ready(out)
    assert out.shape == (batch, size)
    assert jnp.allclose(out, ref, atol=1e-5, rtol=1e-5), "resident mismatch"

    # Streaming mode: per-layer weight DMA overlapped with compute (selected
    # automatically for large L*Sp; forced here to exercise the path).
    out_s = highway_network(x, params, weight_dtype=jnp.float32,
                            stream_layers=True)
    out_s = jax.block_until_ready(out_s)
    assert jnp.allclose(out_s, ref, atol=1e-5, rtol=1e-5), "streaming mismatch"

    print("KERNEL_OK")
</pallas_src>

<mosaic_0001>
module attributes {stable_mosaic.version = 11 : i64} {
  func.func @kernel(%arg0: i32, %arg1: memref<8x128xf32, #tpu.memory_space<vmem>>, %arg2: memref<3x128x384xf32, #tpu.memory_space<vmem>>, %arg3: memref<8x128xf32, #tpu.memory_space<vmem>>) attributes {dimension_semantics = [#tpu.dimension_semantics<parallel>], iteration_bounds = array<i64: 1>, scalar_prefetch = 0 : i64, scratch_operands = 0 : i64, tpu.core_type = #tpu.core_type<tc>, window_params = [{transform_indices = @transform_0, window_bounds = array<i64: 8, 128>}, {pipeline_mode = #tpu.pipeline_mode<synchronous>, transform_indices = @transform_1, window_bounds = array<i64: 3, 128, 384>}, {transform_indices = @transform_2, window_bounds = array<i64: 8, 128>}]} {
    %c0 = arith.constant 0 : index
    %c0_0 = arith.constant 0 : index
    %0 = vector.load %arg1[%c0, %c0_0] : memref<8x128xf32, #tpu.memory_space<vmem>>, vector<8x128xf32>
    %c0_i32 = arith.constant 0 : i32
    %1 = arith.index_cast %c0_i32 : i32 to index
    %c0_1 = arith.constant 0 : index
    %c0_2 = arith.constant 0 : index
    %2 = vector.load %arg2[%1, %c0_1, %c0_2] : memref<3x128x384xf32, #tpu.memory_space<vmem>>, vector<1x128x384xf32>
    %3 = vector.shape_cast %2 : vector<1x128x384xf32> to vector<128x384xf32>
    %cst = arith.constant dense<0.000000e+00> : vector<8x384xf32>
    %4 = tpu.matmul %0, %3, %cst {dimension_numbers = #tpu.dot_dimension_numbers<[1], [0], [0], [1], [0, 0, 1, 1], [], []>} : vector<8x128xf32>, vector<128x384xf32>, vector<8x384xf32> -> vector<8x384xf32>
    %5 = vector.extract_strided_slice %4 {offsets = [0, 0], sizes = [8, 128], strides = [1, 1]} : vector<8x384xf32> to vector<8x128xf32>
    %cst_3 = arith.constant 0.000000e+00 : f32
    %6 = vector.broadcast %cst_3 : f32 to vector<8x128xf32>
    %7 = arith.maximumf %5, %6 : vector<8x128xf32>
    %8 = vector.extract_strided_slice %4 {offsets = [0, 128], sizes = [8, 128], strides = [1, 1]} : vector<8x384xf32> to vector<8x128xf32>
    %9 = arith.negf %8 : vector<8x128xf32>
    %10 = math.exp %9 : vector<8x128xf32>
    %cst_4 = arith.constant 1.000000e+00 : f32
    %11 = vector.broadcast %cst_4 : f32 to vector<8x128xf32>
    %12 = arith.addf %11, %10 : vector<8x128xf32>
    %13 = arith.divf %11, %12 : vector<8x128xf32>
    %14 = vector.extract_strided_slice %4 {offsets = [0, 256], sizes = [8, 128], strides = [1, 1]} : vector<8x384xf32> to vector<8x128xf32>
    %15 = arith.negf %14 : vector<8x128xf32>
    %16 = math.exp %15 : vector<8x128xf32>
    %cst_5 = arith.constant 1.000000e+00 : f32
    %17 = vector.broadcast %cst_5 : f32 to vector<8x128xf32>
    %18 = arith.addf %17, %16 : vector<8x128xf32>
    %19 = arith.divf %17, %18 : vector<8x128xf32>
    %20 = arith.mulf %7, %13 : vector<8x128xf32>
    %21 = arith.subf %0, %20 : vector<8x128xf32>
    %22 = arith.mulf %19, %21 : vector<8x128xf32>
    %23 = arith.addf %20, %22 : vector<8x128xf32>
    %c1_i32 = arith.constant 1 : i32
    %24 = arith.index_cast %c1_i32 : i32 to index
    %c0_6 = arith.constant 0 : index
    %c0_7 = arith.constant 0 : index
    %25 = vector.load %arg2[%24, %c0_6, %c0_7] : memref<3x128x384xf32, #tpu.memory_space<vmem>>, vector<1x128x384xf32>
    %26 = vector.shape_cast %25 : vector<1x128x384xf32> to vector<128x384xf32>
    %cst_8 = arith.constant dense<0.000000e+00> : vector<8x384xf32>
    %27 = tpu.matmul %23, %26, %cst_8 {dimension_numbers = #tpu.dot_dimension_numbers<[1], [0], [0], [1], [0, 0, 1, 1], [], []>} : vector<8x128xf32>, vector<128x384xf32>, vector<8x384xf32> -> vector<8x384xf32>
    %28 = vector.extract_strided_slice %27 {offsets = [0, 0], sizes = [8, 128], strides = [1, 1]} : vector<8x384xf32> to vector<8x128xf32>
    %cst_9 = arith.constant 0.000000e+00 : f32
    %29 = vector.broadcast %cst_9 : f32 to vector<8x128xf32>
    %30 = arith.maximumf %28, %29 : vector<8x128xf32>
    %31 = vector.extract_strided_slice %27 {offsets = [0, 128], sizes = [8, 128], strides = [1, 1]} : vector<8x384xf32> to vector<8x128xf32>
    %32 = arith.negf %31 : vector<8x128xf32>
    %33 = math.exp %32 : vector<8x128xf32>
    %cst_10 = arith.constant 1.000000e+00 : f32
    %34 = vector.broadcast %cst_10 : f32 to vector<8x128xf32>
    %35 = arith.addf %34, %33 : vector<8x128xf32>
    %36 = arith.divf %34, %35 : vector<8x128xf32>
    %37 = vector.extract_strided_slice %27 {offsets = [0, 256], sizes = [8, 128], strides = [1, 1]} : vector<8x384xf32> to vector<8x128xf32>
    %38 = arith.negf %37 : vector<8x128xf32>
    %39 = math.exp %38 : vector<8x128xf32>
    %cst_11 = arith.constant 1.000000e+00 : f32
    %40 = vector.broadcast %cst_11 : f32 to vector<8x128xf32>
    %41 = arith.addf %40, %39 : vector<8x128xf32>
    %42 = arith.divf %40, %41 : vector<8x128xf32>
    %43 = arith.mulf %30, %36 : vector<8x128xf32>
    %44 = arith.subf %23, %43 : vector<8x128xf32>
    %45 = arith.mulf %42, %44 : vector<8x128xf32>
    %46 = arith.addf %43, %45 : vector<8x128xf32>
    %c2_i32 = arith.constant 2 : i32
    %47 = arith.index_cast %c2_i32 : i32 to index
    %c0_12 = arith.constant 0 : index
    %c0_13 = arith.constant 0 : index
    %48 = vector.load %arg2[%47, %c0_12, %c0_13] : memref<3x128x384xf32, #tpu.memory_space<vmem>>, vector<1x128x384xf32>
    %49 = vector.shape_cast %48 : vector<1x128x384xf32> to vector<128x384xf32>
    %cst_14 = arith.constant dense<0.000000e+00> : vector<8x384xf32>
    %50 = tpu.matmul %46, %49, %cst_14 {dimension_numbers = #tpu.dot_dimension_numbers<[1], [0], [0], [1], [0, 0, 1, 1], [], []>} : vector<8x128xf32>, vector<128x384xf32>, vector<8x384xf32> -> vector<8x384xf32>
    %51 = vector.extract_strided_slice %50 {offsets = [0, 0], sizes = [8, 128], strides = [1, 1]} : vector<8x384xf32> to vector<8x128xf32>
    %cst_15 = arith.constant 0.000000e+00 : f32
    %52 = vector.broadcast %cst_15 : f32 to vector<8x128xf32>
    %53 = arith.maximumf %51, %52 : vector<8x128xf32>
    %54 = vector.extract_strided_slice %50 {offsets = [0, 128], sizes = [8, 128], strides = [1, 1]} : vector<8x384xf32> to vector<8x128xf32>
    %55 = arith.negf %54 : vector<8x128xf32>
    %56 = math.exp %55 : vector<8x128xf32>
    %cst_16 = arith.constant 1.000000e+00 : f32
    %57 = vector.broadcast %cst_16 : f32 to vector<8x128xf32>
    %58 = arith.addf %57, %56 : vector<8x128xf32>
    %59 = arith.divf %57, %58 : vector<8x128xf32>
    %60 = vector.extract_strided_slice %50 {offsets = [0, 256], sizes = [8, 128], strides = [1, 1]} : vector<8x384xf32> to vector<8x128xf32>
    %61 = arith.negf %60 : vector<8x128xf32>
    %62 = math.exp %61 : vector<8x128xf32>
    %cst_17 = arith.constant 1.000000e+00 : f32
    %63 = vector.broadcast %cst_17 : f32 to vector<8x128xf32>
    %64 = arith.addf %63, %62 : vector<8x128xf32>
    %65 = arith.divf %63, %64 : vector<8x128xf32>
    %66 = arith.mulf %53, %59 : vector<8x128xf32>
    %67 = arith.subf %46, %66 : vector<8x128xf32>
    %68 = arith.mulf %65, %67 : vector<8x128xf32>
    %69 = arith.addf %66, %68 : vector<8x128xf32>
    %c3_i32 = arith.constant 3 : i32
    %c0_18 = arith.constant 0 : index
    %c0_19 = arith.constant 0 : index
    %70 = vector.load %arg3[%c0_18, %c0_19] : memref<8x128xf32, #tpu.memory_space<vmem>>, vector<8x128xf32>
    tpu.vector_store %arg3[%c0_18, %c0_19], %69 {strides = array<i32>} : memref<8x128xf32, #tpu.memory_space<vmem>>, vector<8x128xf32>,
    return
  }
  func.func @transform_0(%arg0: i32) -> (i32, i32) {
    %c0_i32 = arith.constant 0 : i32
    %c0_i32_0 = arith.constant 0 : i32
    return %arg0, %c0_i32 : i32, i32
  }
  func.func @transform_1(%arg0: i32) -> (i32, i32, i32) {
    %c0_i32 = arith.constant 0 : i32
    %c0_i32_0 = arith.constant 0 : i32
    %c0_i32_1 = arith.constant 0 : i32
    %c0_i32_2 = arith.constant 0 : i32
    return %c0_i32, %c0_i32_0, %c0_i32_1 : i32, i32, i32
  }
  func.func @transform_2(%arg0: i32) -> (i32, i32) {
    %c0_i32 = arith.constant 0 : i32
    %c0_i32_0 = arith.constant 0 : i32
    return %arg0, %c0_i32 : i32, i32
  }
}

</mosaic_0001>

<llo_original>
// kernel: tpu_custom_call.1
$region0: #{tpu_custom_call.1}
  #allocation0 [shape = 'u32[]', space=smem, size = 0x4, offset = 0x4, fixed_abs, tag = 'smem constant byte address 0x4 - core index']
  #allocation1 [shape = 'u32[72,128]{1,0:T(1,128)}', space=vmem, size = 0x9000, scoped, tag = 'internal scratch']
  %s0 = inlined_call_operand.hbm [shape: f32[8,128], index: 0, kind: input, shape index: {}]
  %s1 = inlined_call_operand.hbm [shape: f32[3,128,384], index: 1, kind: input, shape index: {}]
  %s2 = inlined_call_operand.hbm [shape: f32[8,128], index: 2, kind: output, shape index: {}]
  %s3 = sld [smem:[#allocation0]]
  $region26: #{tpu_custom_call.1} parent=0
    _
  %s5 = ssub.s32 1, %s3
  %s6 = scalar_select 0, %s5, %s3
  $region1: #{tpu_custom_call.1} parent=0
    #allocation2 [shape = 'u8[4096]{0}', space=vmem, size = 0x1000, scoped, tag = 'input window, operand 0, single buffered']
    #allocation3 [shape = 's32[1]{0}', space=sflag, size = 0x4, scoped, tag = 'scoped memory for tpu_custom_call.1']
    #allocation4 [shape = 's32[1]{0}', space=sflag, size = 0x4, scoped, tag = 'scoped memory for tpu_custom_call.1']
    #allocation5 [shape = 'u8[589824]{0}', space=vmem, size = 0x90000, scoped, tag = 'input window, operand 1, single buffered']
    #allocation6 [shape = 's32[1]{0}', space=sflag, size = 0x4, scoped, tag = 'scoped memory for tpu_custom_call.1']
    #allocation7 [shape = 'u8[4096]{0}', space=vmem, size = 0x1000, scoped, tag = 'output window, operand 0, single buffered']
    %7 = vsyncpa [#allocation3], 0
    %8 = vsyncpa [#allocation6], 0
    %9 = vsyncpa [#allocation4], 0
    // Predicated region
    $region2: #{tpu_custom_call.1} parent=1 // pred_check
      _
    $region3: #{tpu_custom_call.1} parent=1 // pred_check_branch
      %11 = sbr.rel (0) target = $region5
    $region4: #{tpu_custom_call.1} parent=1 // pred_region
      %13 = vsyncadd [#allocation3], 0
      %s15 = sshll.u32 %s0, 4
      %s16 = int_to_ptr.hbm [resolvable:$true] %s15
      %s17 = sshll.u32 [#allocation2], 4
      %s18 = int_to_ptr.vmem [resolvable:$true] %s17
      %20 = dma.hbm_to_vmem [thread:$0]  %s16, 128, %s18, [#allocation3]
    $region5: #{tpu_custom_call.1} parent=1 // pred_fallthru
      _
    // Predicated region
    $region6: #{tpu_custom_call.1} parent=1 // pred_check
      _
    $region7: #{tpu_custom_call.1} parent=1 // pred_check_branch
      %22 = sbr.rel (0) target = $region9
    $region8: #{tpu_custom_call.1} parent=1 // pred_region
      %24 = vsyncadd [#allocation6], 0
      %s25 = sshll.u32 %s1, 4
      %s26 = int_to_ptr.hbm [resolvable:$true] %s25
      %s27 = sshll.u32 [#allocation5], 4
      %s28 = int_to_ptr.vmem [resolvable:$true] %s27
      %33 = dma.hbm_to_vmem [thread:$0]  %s26, 18432, %s28, [#allocation6], 384, 384, 24
    $region9: #{tpu_custom_call.1} parent=1 // pred_fallthru
      _
    // Predicated region
    $region10: #{tpu_custom_call.1} parent=1 // pred_check
      _
    $region11: #{tpu_custom_call.1} parent=1 // pred_check_branch
      %35 = sbr.rel (0) target = $region13
    $region12: #{tpu_custom_call.1} parent=1 // pred_region
      %37 = dma.done [#allocation3], 128
    $region13: #{tpu_custom_call.1} parent=1 // pred_fallthru
      _
    // Predicated region
    $region14: #{tpu_custom_call.1} parent=1 // pred_check
      _
    $region15: #{tpu_custom_call.1} parent=1 // pred_check_branch
      %39 = sbr.rel (0) target = $region17
    $region16: #{tpu_custom_call.1} parent=1 // pred_region
      %41 = dma.done [#allocation6], 18432
    $region17: #{tpu_custom_call.1} parent=1 // pred_fallthru
      _
    %v42 = vld [vmem:[#allocation2] sm:$0xff]
    %v43 = vld [vmem:[#allocation5] sm:$0xff]
    %v44 = vld [vmem:[#allocation5 + $0x8] sm:$0xff]
    %v45 = vld [vmem:[#allocation5 + $0x10] sm:$0xff]
    %v46 = vld [vmem:[#allocation5 + $0x18] sm:$0xff]
    %v47 = vld [vmem:[#allocation5 + $0x20] sm:$0xff]
    %v48 = vld [vmem:[#allocation5 + $0x28] sm:$0xff]
    %v49 = vld [vmem:[#allocation5 + $0x30] sm:$0xff]
    %v50 = vld [vmem:[#allocation5 + $0x38] sm:$0xff]
    %v51 = vld [vmem:[#allocation5 + $0x40] sm:$0xff]
    %v52 = vld [vmem:[#allocation5 + $0x48] sm:$0xff]
    %v53 = vld [vmem:[#allocation5 + $0x50] sm:$0xff]
    %v54 = vld [vmem:[#allocation5 + $0x58] sm:$0xff]
    %v55 = vld [vmem:[#allocation5 + $0x60] sm:$0xff]
    %v56 = vld [vmem:[#allocation5 + $0x68] sm:$0xff]
    %v57 = vld [vmem:[#allocation5 + $0x70] sm:$0xff]
    %v58 = vld [vmem:[#allocation5 + $0x78] sm:$0xff]
    %v59 = vld [vmem:[#allocation5 + $0x80] sm:$0xff]
    %v60 = vld [vmem:[#allocation5 + $0x88] sm:$0xff]
    %v61 = vld [vmem:[#allocation5 + $0x90] sm:$0xff]
    %v62 = vld [vmem:[#allocation5 + $0x98] sm:$0xff]
    %v63 = vld [vmem:[#allocation5 + $0xa0] sm:$0xff]
    %v64 = vld [vmem:[#allocation5 + $0xa8] sm:$0xff]
    %v65 = vld [vmem:[#allocation5 + $0xb0] sm:$0xff]
    %v66 = vld [vmem:[#allocation5 + $0xb8] sm:$0xff]
    %v67 = vld [vmem:[#allocation5 + $0xc0] sm:$0xff]
    %v68 = vld [vmem:[#allocation5 + $0xc8] sm:$0xff]
    %v69 = vld [vmem:[#allocation5 + $0xd0] sm:$0xff]
    %v70 = vld [vmem:[#allocation5 + $0xd8] sm:$0xff]
    %v71 = vld [vmem:[#allocation5 + $0xe0] sm:$0xff]
    %v72 = vld [vmem:[#allocation5 + $0xe8] sm:$0xff]
    %v73 = vld [vmem:[#allocation5 + $0xf0] sm:$0xff]
    %v74 = vld [vmem:[#allocation5 + $0xf8] sm:$0xff]
    %v75 = vld [vmem:[#allocation5 + $0x100] sm:$0xff]
    %v76 = vld [vmem:[#allocation5 + $0x108] sm:$0xff]
    %v77 = vld [vmem:[#allocation5 + $0x110] sm:$0xff]
    %v78 = vld [vmem:[#allocation5 + $0x118] sm:$0xff]
    %v79 = vld [vmem:[#allocation5 + $0x120] sm:$0xff]
    %v80 = vld [vmem:[#allocation5 + $0x128] sm:$0xff]
    %v81 = vld [vmem:[#allocation5 + $0x130] sm:$0xff]
    %v82 = vld [vmem:[#allocation5 + $0x138] sm:$0xff]
    %v83 = vld [vmem:[#allocation5 + $0x140] sm:$0xff]
    %v84 = vld [vmem:[#allocation5 + $0x148] sm:$0xff]
    %v85 = vld [vmem:[#allocation5 + $0x150] sm:$0xff]
    %v86 = vld [vmem:[#allocation5 + $0x158] sm:$0xff]
    %v87 = vld [vmem:[#allocation5 + $0x160] sm:$0xff]
    %v88 = vld [vmem:[#allocation5 + $0x168] sm:$0xff]
    %v89 = vld [vmem:[#allocation5 + $0x170] sm:$0xff]
    %v90 = vld [vmem:[#allocation5 + $0x178] sm:$0xff]
    %91 = vmatpush.msra.mxu0 %v88
    %92 = vmatpush.msra.mxu0 %v85
    %93 = vmatpush.msra.mxu0 %v82
    %94 = vmatpush.msra.mxu0 %v79
    %95 = vmatpush.msra.mxu0 %v76
    %96 = vmatpush.msra.mxu0 %v73
    %97 = vmatpush.msra.mxu0 %v70
    %98 = vmatpush.msra.mxu0 %v67
    %99 = vmatpush.msra.mxu0 %v64
    %100 = vmatpush.msra.mxu0 %v61
    %101 = vmatpush.msra.mxu0 %v58
    %102 = vmatpush.msra.mxu0 %v55
    %103 = vmatpush.msra.mxu0 %v52
    %104 = vmatpush.msra.mxu0 %v49
    %105 = vmatpush.msra.mxu0 %v46
    %106 = vmatpush.msra.mxu0 %v43
    %107 = vmatmul.f32.gmra.mxu0 %v42
    %v108 = vpop.f32.mrf.mxu0
    %v109 = vadd.f32 0.0, %v108
    %110 = vdwg.mxu0
    %111 = vmatpush.msra.mxu0 %v89
    %112 = vmatpush.msra.mxu0 %v86
    %113 = vmatpush.msra.mxu0 %v83
    %114 = vmatpush.msra.mxu0 %v80
    %115 = vmatpush.msra.mxu0 %v77
    %116 = vmatpush.msra.mxu0 %v74
    %117 = vmatpush.msra.mxu0 %v71
    %118 = vmatpush.msra.mxu0 %v68
    %119 = vmatpush.msra.mxu0 %v65
    %120 = vmatpush.msra.mxu0 %v62
    %121 = vmatpush.msra.mxu0 %v59
    %122 = vmatpush.msra.mxu0 %v56
    %123 = vmatpush.msra.mxu0 %v53
    %124 = vmatpush.msra.mxu0 %v50
    %125 = vmatpush.msra.mxu0 %v47
    %126 = vmatpush.msra.mxu0 %v44
    %127 = vmatmul.f32.gmra.mxu0 %v42
    %v128 = vpop.f32.mrf.mxu0
    %v129 = vadd.f32 0.0, %v128
    %130 = vdwg.mxu0
    %131 = vmatpush.msra.mxu0 %v90
    %132 = vmatpush.msra.mxu0 %v87
    %133 = vmatpush.msra.mxu0 %v84
    %134 = vmatpush.msra.mxu0 %v81
    %135 = vmatpush.msra.mxu0 %v78
    %136 = vmatpush.msra.mxu0 %v75
    %137 = vmatpush.msra.mxu0 %v72
    %138 = vmatpush.msra.mxu0 %v69
    %139 = vmatpush.msra.mxu0 %v66
    %140 = vmatpush.msra.mxu0 %v63
    %141 = vmatpush.msra.mxu0 %v60
    %142 = vmatpush.msra.mxu0 %v57
    %143 = vmatpush.msra.mxu0 %v54
    %144 = vmatpush.msra.mxu0 %v51
    %145 = vmatpush.msra.mxu0 %v48
    %146 = vmatpush.msra.mxu0 %v45
    %147 = vmatmul.f32.gmra.mxu0 %v42
    %v148 = vpop.f32.mrf.mxu0
    %v149 = vadd.f32 0.0, %v148
    %150 = vdwg.mxu0
    %v151 = vmax.f32 %v109, 0.0
    %v152 = vxor.u32 %v129, 2147483648
    %v153 = vmul.f32 %v152, 1.442695
    %v154 = vpow.pop %v153
    %v155 = vadd.f32 %v154, 1.0
    %v156 = vrcp.pop %v155
    %v157 = vmul.f32 %v155, %v156
    %v158 = vsub.f32 1.0, %v157
    %v159 = vmul.f32 %v156, %v158
    %v160 = vadd.f32 %v156, %v159
    %vm161 = vweird.f32 %v155
    %vm162 = vweird.f32 %v156
    %vm163 = vmor %vm161, %vm162
    %v164 = vsel %vm163, %v156, %v160
    %v165 = vand.u32 2147483647, %v155
    %vm166 = vcmp.eq.f32.partialorder %v165, 8.507059e+37
    %v167 = vand.u32 %v155, 2147483648
    %v168 = vor.u32 1.1754944e-38, %v167
    %v169 = vsel %vm166, %v168, %v164
    %v170 = vmul.f32 1.0, %v169
    %v171 = vxor.u32 %v149, 2147483648
    %v172 = vmul.f32 %v171, 1.442695
    %v173 = vpow.pop %v172
    %v174 = vadd.f32 %v173, 1.0
    %v175 = vrcp.pop %v174
    %v176 = vmul.f32 %v174, %v175
    %v177 = vsub.f32 1.0, %v176
    %v178 = vmul.f32 %v175, %v177
    %v179 = vadd.f32 %v175, %v178
    %vm180 = vweird.f32 %v174
    %vm181 = vweird.f32 %v175
    %vm182 = vmor %vm180, %vm181
    %v183 = vsel %vm182, %v175, %v179
    %v184 = vand.u32 2147483647, %v174
    %vm185 = vcmp.eq.f32.partialorder %v184, 8.507059e+37
    %v186 = vand.u32 %v174, 2147483648
    %v187 = vor.u32 1.1754944e-38, %v186
    %v188 = vsel %vm185, %v187, %v183
    %v189 = vmul.f32 1.0, %v188
    %v190 = vmul.f32 %v151, %v170
    %v191 = vsub.f32 %v42, %v190
    %v192 = vmul.f32 %v189, %v191
    %v193 = vadd.f32 %v190, %v192
    %s194 = scalar_lea.vmem [#allocation5], 384
    %v195 = vld [vmem:[%s194] sm:$0xff]
    %v196 = vld [vmem:[%s194 + $0x8] sm:$0xff]
    %v197 = vld [vmem:[%s194 + $0x10] sm:$0xff]
    %v198 = vld [vmem:[%s194 + $0x18] sm:$0xff]
    %v199 = vld [vmem:[%s194 + $0x20] sm:$0xff]
    %v200 = vld [vmem:[%s194 + $0x28] sm:$0xff]
    %v201 = vld [vmem:[%s194 + $0x30] sm:$0xff]
    %v202 = vld [vmem:[%s194 + $0x38] sm:$0xff]
    %v203 = vld [vmem:[%s194 + $0x40] sm:$0xff]
    %v204 = vld [vmem:[%s194 + $0x48] sm:$0xff]
    %v205 = vld [vmem:[%s194 + $0x50] sm:$0xff]
    %v206 = vld [vmem:[%s194 + $0x58] sm:$0xff]
    %v207 = vld [vmem:[%s194 + $0x60] sm:$0xff]
    %v208 = vld [vmem:[%s194 + $0x68] sm:$0xff]
    %v209 = vld [vmem:[%s194 + $0x70] sm:$0xff]
    %v210 = vld [vmem:[%s194 + $0x78] sm:$0xff]
    %v211 = vld [vmem:[%s194 + $0x80] sm:$0xff]
    %v212 = vld [vmem:[%s194 + $0x88] sm:$0xff]
    %v213 = vld [vmem:[%s194 + $0x90] sm:$0xff]
    %v214 = vld [vmem:[%s194 + $0x98] sm:$0xff]
    %v215 = vld [vmem:[%s194 + $0xa0] sm:$0xff]
    %v216 = vld [vmem:[%s194 + $0xa8] sm:$0xff]
    %v217 = vld [vmem:[%s194 + $0xb0] sm:$0xff]
    %v218 = vld [vmem:[%s194 + $0xb8] sm:$0xff]
    %v219 = vld [vmem:[%s194 + $0xc0] sm:$0xff]
    %v220 = vld [vmem:[%s194 + $0xc8] sm:$0xff]
    %v221 = vld [vmem:[%s194 + $0xd0] sm:$0xff]
    %v222 = vld [vmem:[%s194 + $0xd8] sm:$0xff]
    %v223 = vld [vmem:[%s194 + $0xe0] sm:$0xff]
    %v224 = vld [vmem:[%s194 + $0xe8] sm:$0xff]
    %v225 = vld [vmem:[%s194 + $0xf0] sm:$0xff]
    %v226 = vld [vmem:[%s194 + $0xf8] sm:$0xff]
    %v227 = vld [vmem:[%s194 + $0x100] sm:$0xff]
    %v228 = vld [vmem:[%s194 + $0x108] sm:$0xff]
    %v229 = vld [vmem:[%s194 + $0x110] sm:$0xff]
    %v230 = vld [vmem:[%s194 + $0x118] sm:$0xff]
    %v231 = vld [vmem:[%s194 + $0x120] sm:$0xff]
    %v232 = vld [vmem:[%s194 + $0x128] sm:$0xff]
    %v233 = vld [vmem:[%s194 + $0x130] sm:$0xff]
    %v234 = vld [vmem:[%s194 + $0x138] sm:$0xff]
    %v235 = vld [vmem:[%s194 + $0x140] sm:$0xff]
    %v236 = vld [vmem:[%s194 + $0x148] sm:$0xff]
    %v237 = vld [vmem:[%s194 + $0x150] sm:$0xff]
    %v238 = vld [vmem:[%s194 + $0x158] sm:$0xff]
    %v239 = vld [vmem:[%s194 + $0x160] sm:$0xff]
    %v240 = vld [vmem:[%s194 + $0x168] sm:$0xff]
    %v241 = vld [vmem:[%s194 + $0x170] sm:$0xff]
    %v242 = vld [vmem:[%s194 + $0x178] sm:$0xff]
    %243 = vmatpush.msra.mxu0 %v240
    %244 = vmatpush.msra.mxu0 %v237
    %245 = vmatpush.msra.mxu0 %v234
    %246 = vmatpush.msra.mxu0 %v231
    %247 = vmatpush.msra.mxu0 %v228
    %248 = vmatpush.msra.mxu0 %v225
    %249 = vmatpush.msra.mxu0 %v222
    %250 = vmatpush.msra.mxu0 %v219
    %251 = vmatpush.msra.mxu0 %v216
    %252 = vmatpush.msra.mxu0 %v213
    %253 = vmatpush.msra.mxu0 %v210
    %254 = vmatpush.msra.mxu0 %v207
    %255 = vmatpush.msra.mxu0 %v204
    %256 = vmatpush.msra.mxu0 %v201
    %257 = vmatpush.msra.mxu0 %v198
    %258 = vmatpush.msra.mxu0 %v195
    %259 = vmatmul.f32.gmra.mxu0 %v193
    %v260 = vpop.f32.mrf.mxu0
    %v261 = vadd.f32 0.0, %v260
    %262 = vdwg.mxu0
    %263 = vmatpush.msra.mxu0 %v241
    %264 = vmatpush.msra.mxu0 %v238
    %265 = vmatpush.msra.mxu0 %v235
    %266 = vmatpush.msra.mxu0 %v232
    %267 = vmatpush.msra.mxu0 %v229
    %268 = vmatpush.msra.mxu0 %v226
    %269 = vmatpush.msra.mxu0 %v223
    %270 = vmatpush.msra.mxu0 %v220
    %271 = vmatpush.msra.mxu0 %v217
    %272 = vmatpush.msra.mxu0 %v214
    %273 = vmatpush.msra.mxu0 %v211
    %274 = vmatpush.msra.mxu0 %v208
    %275 = vmatpush.msra.mxu0 %v205
    %276 = vmatpush.msra.mxu0 %v202
    %277 = vmatpush.msra.mxu0 %v199
    %278 = vmatpush.msra.mxu0 %v196
    %279 = vmatmul.f32.gmra.mxu0 %v193
    %v280 = vpop.f32.mrf.mxu0
    %v281 = vadd.f32 0.0, %v280
    %282 = vdwg.mxu0
    %283 = vmatpush.msra.mxu0 %v242
    %284 = vmatpush.msra.mxu0 %v239
    %285 = vmatpush.msra.mxu0 %v236
    %286 = vmatpush.msra.mxu0 %v233
    %287 = vmatpush.msra.mxu0 %v230
    %288 = vmatpush.msra.mxu0 %v227
    %289 = vmatpush.msra.mxu0 %v224
    %290 = vmatpush.msra.mxu0 %v221
    %291 = vmatpush.msra.mxu0 %v218
    %292 = vmatpush.msra.mxu0 %v215
    %293 = vmatpush.msra.mxu0 %v212
    %294 = vmatpush.msra.mxu0 %v209
    %295 = vmatpush.msra.mxu0 %v206
    %296 = vmatpush.msra.mxu0 %v203
    %297 = vmatpush.msra.mxu0 %v200
    %298 = vmatpush.msra.mxu0 %v197
    %299 = vmatmul.f32.gmra.mxu0 %v193
    %v300 = vpop.f32.mrf.mxu0
    %v301 = vadd.f32 0.0, %v300
    %302 = vdwg.mxu0
    %v303 = vmax.f32 %v261, 0.0
    %v304 = vxor.u32 %v281, 2147483648
    %v305 = vmul.f32 %v304, 1.442695
    %v306 = vpow.pop %v305
    %v307 = vadd.f32 %v306, 1.0
    %v308 = vrcp.pop %v307
    %v309 = vmul.f32 %v307, %v308
    %v310 = vsub.f32 1.0, %v309
    %v311 = vmul.f32 %v308, %v310
    %v312 = vadd.f32 %v308, %v311
    %vm313 = vweird.f32 %v307
    %vm314 = vweird.f32 %v308
    %vm315 = vmor %vm313, %vm314
    %v316 = vsel %vm315, %v308, %v312
    %v317 = vand.u32 2147483647, %v307
    %vm318 = vcmp.eq.f32.partialorder %v317, 8.507059e+37
    %v319 = vand.u32 %v307, 2147483648
    %v320 = vor.u32 1.1754944e-38, %v319
    %v321 = vsel %vm318, %v320, %v316
    %v322 = vmul.f32 1.0, %v321
    %v323 = vxor.u32 %v301, 2147483648
    %v324 = vmul.f32 %v323, 1.442695
    %v325 = vpow.pop %v324
    %v326 = vadd.f32 %v325, 1.0
    %v327 = vrcp.pop %v326
    %v328 = vmul.f32 %v326, %v327
    %v329 = vsub.f32 1.0, %v328
    %v330 = vmul.f32 %v327, %v329
    %v331 = vadd.f32 %v327, %v330
    %vm332 = vweird.f32 %v326
    %vm333 = vweird.f32 %v327
    %vm334 = vmor %vm332, %vm333
    %v335 = vsel %vm334, %v327, %v331
    %v336 = vand.u32 2147483647, %v326
    %vm337 = vcmp.eq.f32.partialorder %v336, 8.507059e+37
    %v338 = vand.u32 %v326, 2147483648
    %v339 = vor.u32 1.1754944e-38, %v338
    %v340 = vsel %vm337, %v339, %v335
    %v341 = vmul.f32 1.0, %v340
    %v342 = vmul.f32 %v303, %v322
    %v343 = vsub.f32 %v193, %v342
    %v344 = vmul.f32 %v341, %v343
    %v345 = vadd.f32 %v342, %v344
    %s346 = scalar_lea.vmem [#allocation5], 768
    %v347 = vld [vmem:[%s346] sm:$0xff]
    %v348 = vld [vmem:[%s346 + $0x8] sm:$0xff]
    %v349 = vld [vmem:[%s346 + $0x10] sm:$0xff]
    %v350 = vld [vmem:[%s346 + $0x18] sm:$0xff]
    %v351 = vld [vmem:[%s346 + $0x20] sm:$0xff]
    %v352 = vld [vmem:[%s346 + $0x28] sm:$0xff]
    %v353 = vld [vmem:[%s346 + $0x30] sm:$0xff]
    %v354 = vld [vmem:[%s346 + $0x38] sm:$0xff]
    %v355 = vld [vmem:[%s346 + $0x40] sm:$0xff]
    %v356 = vld [vmem:[%s346 + $0x48] sm:$0xff]
    %v357 = vld [vmem:[%s346 + $0x50] sm:$0xff]
    %v358 = vld [vmem:[%s346 + $0x58] sm:$0xff]
    %v359 = vld [vmem:[%s346 + $0x60] sm:$0xff]
    %v360 = vld [vmem:[%s346 + $0x68] sm:$0xff]
    %v361 = vld [vmem:[%s346 + $0x70] sm:$0xff]
    %v362 = vld [vmem:[%s346 + $0x78] sm:$0xff]
    %v363 = vld [vmem:[%s346 + $0x80] sm:$0xff]
    %v364 = vld [vmem:[%s346 + $0x88] sm:$0xff]
    %v365 = vld [vmem:[%s346 + $0x90] sm:$0xff]
    %v366 = vld [vmem:[%s346 + $0x98] sm:$0xff]
    %v367 = vld [vmem:[%s346 + $0xa0] sm:$0xff]
    %v368 = vld [vmem:[%s346 + $0xa8] sm:$0xff]
    %v369 = vld [vmem:[%s346 + $0xb0] sm:$0xff]
    %v370 = vld [vmem:[%s346 + $0xb8] sm:$0xff]
    %v371 = vld [vmem:[%s346 + $0xc0] sm:$0xff]
    %v372 = vld [vmem:[%s346 + $0xc8] sm:$0xff]
    %v373 = vld [vmem:[%s346 + $0xd0] sm:$0xff]
    %v374 = vld [vmem:[%s346 + $0xd8] sm:$0xff]
    %v375 = vld [vmem:[%s346 + $0xe0] sm:$0xff]
    %v376 = vld [vmem:[%s346 + $0xe8] sm:$0xff]
    %v377 = vld [vmem:[%s346 + $0xf0] sm:$0xff]
    %v378 = vld [vmem:[%s346 + $0xf8] sm:$0xff]
    %v379 = vld [vmem:[%s346 + $0x100] sm:$0xff]
    %v380 = vld [vmem:[%s346 + $0x108] sm:$0xff]
    %v381 = vld [vmem:[%s346 + $0x110] sm:$0xff]
    %v382 = vld [vmem:[%s346 + $0x118] sm:$0xff]
    %v383 = vld [vmem:[%s346 + $0x120] sm:$0xff]
    %v384 = vld [vmem:[%s346 + $0x128] sm:$0xff]
    %v385 = vld [vmem:[%s346 + $0x130] sm:$0xff]
    %v386 = vld [vmem:[%s346 + $0x138] sm:$0xff]
    %v387 = vld [vmem:[%s346 + $0x140] sm:$0xff]
    %v388 = vld [vmem:[%s346 + $0x148] sm:$0xff]
    %v389 = vld [vmem:[%s346 + $0x150] sm:$0xff]
    %v390 = vld [vmem:[%s346 + $0x158] sm:$0xff]
    %v391 = vld [vmem:[%s346 + $0x160] sm:$0xff]
    %v392 = vld [vmem:[%s346 + $0x168] sm:$0xff]
    %v393 = vld [vmem:[%s346 + $0x170] sm:$0xff]
    %v394 = vld [vmem:[%s346 + $0x178] sm:$0xff]
    %395 = vmatpush.msra.mxu0 %v392
    %396 = vmatpush.msra.mxu0 %v389
    %397 = vmatpush.msra.mxu0 %v386
    %398 = vmatpush.msra.mxu0 %v383
    %399 = vmatpush.msra.mxu0 %v380
    %400 = vmatpush.msra.mxu0 %v377
    %401 = vmatpush.msra.mxu0 %v374
    %402 = vmatpush.msra.mxu0 %v371
    %403 = vmatpush.msra.mxu0 %v368
    %404 = vmatpush.msra.mxu0 %v365
    %405 = vmatpush.msra.mxu0 %v362
    %406 = vmatpush.msra.mxu0 %v359
    %407 = vmatpush.msra.mxu0 %v356
    %408 = vmatpush.msra.mxu0 %v353
    %409 = vmatpush.msra.mxu0 %v350
    %410 = vmatpush.msra.mxu0 %v347
    %411 = vmatmul.f32.gmra.mxu0 %v345
    %v412 = vpop.f32.mrf.mxu0
    %v413 = vadd.f32 0.0, %v412
    %414 = vdwg.mxu0
    %415 = vmatpush.msra.mxu0 %v393
    %416 = vmatpush.msra.mxu0 %v390
    %417 = vmatpush.msra.mxu0 %v387
    %418 = vmatpush.msra.mxu0 %v384
    %419 = vmatpush.msra.mxu0 %v381
    %420 = vmatpush.msra.mxu0 %v378
    %421 = vmatpush.msra.mxu0 %v375
    %422 = vmatpush.msra.mxu0 %v372
    %423 = vmatpush.msra.mxu0 %v369
    %424 = vmatpush.msra.mxu0 %v366
    %425 = vmatpush.msra.mxu0 %v363
    %426 = vmatpush.msra.mxu0 %v360
    %427 = vmatpush.msra.mxu0 %v357
    %428 = vmatpush.msra.mxu0 %v354
    %429 = vmatpush.msra.mxu0 %v351
    %430 = vmatpush.msra.mxu0 %v348
    %431 = vmatmul.f32.gmra.mxu0 %v345
    %v432 = vpop.f32.mrf.mxu0
    %v433 = vadd.f32 0.0, %v432
    %434 = vdwg.mxu0
    %435 = vmatpush.msra.mxu0 %v394
    %436 = vmatpush.msra.mxu0 %v391
    %437 = vmatpush.msra.mxu0 %v388
    %438 = vmatpush.msra.mxu0 %v385
    %439 = vmatpush.msra.mxu0 %v382
    %440 = vmatpush.msra.mxu0 %v379
    %441 = vmatpush.msra.mxu0 %v376
    %442 = vmatpush.msra.mxu0 %v373
    %443 = vmatpush.msra.mxu0 %v370
    %444 = vmatpush.msra.mxu0 %v367
    %445 = vmatpush.msra.mxu0 %v364
    %446 = vmatpush.msra.mxu0 %v361
    %447 = vmatpush.msra.mxu0 %v358
    %448 = vmatpush.msra.mxu0 %v355
    %449 = vmatpush.msra.mxu0 %v352
    %450 = vmatpush.msra.mxu0 %v349
    %451 = vmatmul.f32.gmra.mxu0 %v345
    %v452 = vpop.f32.mrf.mxu0
    %v453 = vadd.f32 0.0, %v452
    %454 = vdwg.mxu0
    %v455 = vmax.f32 %v413, 0.0
    %v456 = vxor.u32 %v433, 2147483648
    %v457 = vmul.f32 %v456, 1.442695
    %v458 = vpow.pop %v457
    %v459 = vadd.f32 %v458, 1.0
    %v460 = vrcp.pop %v459
    %v461 = vmul.f32 %v459, %v460
    %v462 = vsub.f32 1.0, %v461
    %v463 = vmul.f32 %v460, %v462
    %v464 = vadd.f32 %v460, %v463
    %vm465 = vweird.f32 %v459
    %vm466 = vweird.f32 %v460
    %vm467 = vmor %vm465, %vm466
    %v468 = vsel %vm467, %v460, %v464
    %v469 = vand.u32 2147483647, %v459
    %vm470 = vcmp.eq.f32.partialorder %v469, 8.507059e+37
    %v471 = vand.u32 %v459, 2147483648
    %v472 = vor.u32 1.1754944e-38, %v471
    %v473 = vsel %vm470, %v472, %v468
    %v474 = vmul.f32 1.0, %v473
    %v475 = vxor.u32 %v453, 2147483648
    %v476 = vmul.f32 %v475, 1.442695
    %v477 = vpow.pop %v476
    %v478 = vadd.f32 %v477, 1.0
    %v479 = vrcp.pop %v478
    %v480 = vmul.f32 %v478, %v479
    %v481 = vsub.f32 1.0, %v480
    %v482 = vmul.f32 %v479, %v481
    %v483 = vadd.f32 %v479, %v482
    %vm484 = vweird.f32 %v478
    %vm485 = vweird.f32 %v479
    %vm486 = vmor %vm484, %vm485
    %v487 = vsel %vm486, %v479, %v483
    %v488 = vand.u32 2147483647, %v478
    %vm489 = vcmp.eq.f32.partialorder %v488, 8.507059e+37
    %v490 = vand.u32 %v478, 2147483648
    %v491 = vor.u32 1.1754944e-38, %v490
    %v492 = vsel %vm489, %v491, %v487
    %v493 = vmul.f32 1.0, %v492
    %v494 = vmul.f32 %v455, %v474
    %v495 = vsub.f32 %v345, %v494
    %v496 = vmul.f32 %v493, %v495
    %v497 = vadd.f32 %v494, %v496
    %498 = vst [vmem:[#allocation7] sm:$0xff] %v497
    // Predicated region
    $region18: #{tpu_custom_call.1} parent=1 // pred_check
      _
    $region19: #{tpu_custom_call.1} parent=1 // pred_check_branch
      %500 = sbr.rel (0) target = $region21
    $region20: #{tpu_custom_call.1} parent=1 // pred_region
      %502 = vsyncadd [#allocation4], 0
      %s504 = sshll.u32 [#allocation7], 4
      %s505 = int_to_ptr.vmem [resolvable:$true] %s504
      %s506 = sshll.u32 %s2, 4
      %s507 = int_to_ptr.hbm [resolvable:$true] %s506
      %509 = dma.vmem_to_hbm [thread:$0]  %s505, 128, %s507, [#allocation4]
    $region21: #{tpu_custom_call.1} parent=1 // pred_fallthru
      _
    // Predicated region
    $region22: #{tpu_custom_call.1} parent=1 // pred_check
      _
    $region23: #{tpu_custom_call.1} parent=1 // pred_check_branch
      %511 = sbr.rel (0) target = $region25
    $region24: #{tpu_custom_call.1} parent=1 // pred_region
      %513 = dma.done [#allocation4], 128
    $region25: #{tpu_custom_call.1} parent=1 // pred_fallthru
      _
    %514 = vsyncpa [#allocation3], 1
    %515 = vsyncpa [#allocation6], 1
    %516 = vsyncpa [#allocation4], 1

</llo_original>
